<compile_context>
chip_gen: v7x
topology: tpu7x:2x2x1
jax: 0.10.0
libtpu: 0.0.40
codegen_flags: <defaults>
</compile_context>

<pallas_src>
import functools

import jax
import jax.numpy as jnp
from jax.experimental import pallas as pl
from jax.experimental.pallas import tpu as pltpu


# Tile caps.  Double-buffered VMEM footprint at the caps:
#   x (f32) 512*1024*4*2 = 4 MiB, w (bf16) 1024*512*2*2 = 2 MiB,
#   out (f32) 512*512*4*2 = 2 MiB, f32 accumulator = 1 MiB  ->  ~9 MiB,
# safely under the default scoped-VMEM limit on v5e (16 MiB) and v6e/v7x
# (32 MiB; 64 MiB physical on v7x), so no vmem_limit_bytes override needed.
_TM_MAX = 512
_TK_MAX = 1024
_TN_MAX = 512

_TINY_FLOP_THRESHOLD = 1 << 17  # below this, pallas_call overhead dominates


def _round_up(x: int, m: int) -> int:
    return ((x + m - 1) // m) * m


def _cdiv(a: int, b: int) -> int:
    return -(-a // b)


def _tile_dim(dim: int, max_tile: int, granule: int):
    """Pick a tile size and padded extent for one dimension.

    If the whole dim fits in one block we use the full extent (legal per the
    "divisible by (8,128) OR equal to the full array dim" rule) -> zero pad.
    Otherwise split into the fewest blocks <= max_tile, rounded to `granule`.
    Returns (tile, padded_dim) with padded_dim % tile == 0.
    """
    if dim <= max_tile:
        return dim, dim
    n_blocks = _cdiv(dim, max_tile)
    tile = _round_up(_cdiv(dim, n_blocks), granule)
    return tile, tile * n_blocks


def _linear_kernel(x_ref, w_ref, b_ref, o_ref, acc_ref, *, compute_dtype):
    k = pl.program_id(2)

    @pl.when(k == 0)
    def _init():
        acc_ref[...] = jnp.zeros_like(acc_ref)

    # MXU matmul: bf16 operands (cast here so un-padded f32 x needs no extra
    # HBM round trip in the wrapper), f32 accumulation in resident VMEM.
    acc_ref[...] += jnp.dot(
        x_ref[...].astype(compute_dtype),
        w_ref[...],
        preferred_element_type=jnp.float32,
    )

    @pl.when(k == pl.num_programs(2) - 1)
    def _finalize():
        # Bias added exactly once per (i, j) output tile.
        o_ref[...] = (acc_ref[...] + b_ref[...]).astype(o_ref.dtype)


@functools.partial(
    jax.jit, static_argnames=("tk", "tn", "out_valid", "compute_dtype")
)
def _linear_forward_padded(x, w_pad, b_pad, *, tk, tn, out_valid,
                           compute_dtype=jnp.bfloat16):
    """y = x @ w_pad + b_pad, sliced back to [B, out_valid].

    x:     [B, In]            (f32 or bf16; cast to bf16 inside the kernel)
    w_pad: [Inp, Outp]  bf16  (pre-padded + pre-cast, cached by the caller)
    b_pad: [1, Outp]    f32
    """
    B, In = x.shape
    Inp, Outp = w_pad.shape
    assert In <= Inp and b_pad.shape == (1, Outp)
    cdt = jnp.dtype(compute_dtype)

    # M tiling (16-granule so bf16 x tiles fill full sublane-packed vregs).
    tm, Bp = _tile_dim(B, _TM_MAX, 16)
    n_m_blocks = Bp // tm

    # v7x megacore heuristic: if M collapses to one block, give the "parallel"
    # N axis at least two blocks so both TensorCores get work.
    if n_m_blocks == 1 and tn == Outp and Outp % 256 == 0:
        tn = Outp // 2

    # Activation stream: only materialize a padded copy when actually needed;
    # otherwise pass x straight through and let the kernel do the bf16 cast.
    if (B, In) == (Bp, Inp):
        xp = x
    else:
        xp = jnp.zeros((Bp, Inp), cdt).at[:B, :In].set(x.astype(cdt))

    n_n_blocks = Outp // tn
    grid = (n_m_blocks, n_n_blocks, Inp // tk)

    cost = pl.CostEstimate(
        flops=2 * Bp * Inp * Outp,
        transcendentals=0,
        bytes_accessed=(
            xp.size * xp.dtype.itemsize * n_n_blocks      # x re-streamed per N block
            + w_pad.size * w_pad.dtype.itemsize * n_m_blocks  # w re-streamed per M block
            + b_pad.size * 4 * n_m_blocks                 # bias
            + Bp * Outp * 4                               # output writeback
        ),
    )

    yp = pl.pallas_call(
        functools.partial(_linear_kernel, compute_dtype=cdt),
        out_shape=jax.ShapeDtypeStruct((Bp, Outp), jnp.float32),
        grid_spec=pltpu.PrefetchScalarGridSpec(
            num_scalar_prefetch=0,
            grid=grid,
            in_specs=[
                pl.BlockSpec((tm, tk), lambda i, j, k: (i, k)),   # x tile
                pl.BlockSpec((tk, tn), lambda i, j, k: (k, j)),   # w tile
                pl.BlockSpec((1, tn), lambda i, j, k: (0, j)),    # bias tile
            ],
            out_specs=pl.BlockSpec((tm, tn), lambda i, j, k: (i, j)),
            scratch_shapes=[pltpu.VMEM((tm, tn), jnp.float32)],
        ),
        compiler_params=pltpu.CompilerParams(
            dimension_semantics=("parallel", "parallel", "arbitrary"),
        ),
        cost_estimate=cost,
    )(xp, w_pad, b_pad)

    if (Bp, Outp) != (B, out_valid):
        yp = yp[:B, :out_valid]
    return yp


class LRPallas:
    """JAX/Pallas equivalent of the PyTorch `LR` module's forward pass."""

    def __init__(self, input_size: int, output_size: int, key,
                 compute_dtype=jnp.bfloat16, tiny_fast_path=True):
        self.input_size = input_size
        self.output_size = output_size
        self.compute_dtype = compute_dtype
        self.tiny_fast_path = tiny_fast_path

        # nn.Linear default init: weight (kaiming_uniform, a=sqrt(5)) and bias
        # both end up U(-1/sqrt(fan_in), 1/sqrt(fan_in)).
        kw, kb = jax.random.split(key)
        bound = 1.0 / (input_size ** 0.5)
        # Weight kept pre-transposed as [in, out] so the kernel does x @ W^T.
        self.w_t = jax.random.uniform(
            kw, (input_size, output_size), jnp.float32, -bound, bound)
        self.b = jax.random.uniform(
            kb, (1, output_size), jnp.float32, -bound, bound)

        # --- One-time (cached) weight/bias preparation -----------------------
        # Tiling of K and N depends only on (In, Out), so the padded bf16
        # weight and padded f32 bias are materialized here, not per forward.
        cdt = jnp.dtype(compute_dtype)
        self._tk, self._Inp = _tile_dim(input_size, _TK_MAX, 128)
        self._tn, self._Outp = _tile_dim(output_size, _TN_MAX, 128)

        if (self._Inp, self._Outp) == (input_size, output_size):
            self._w_pad = self.w_t.astype(cdt)
        else:
            self._w_pad = (jnp.zeros((self._Inp, self._Outp), cdt)
                           .at[:input_size, :output_size]
                           .set(self.w_t.astype(cdt)))
        if self._Outp == output_size:
            self._b_pad = self.b
        else:
            self._b_pad = (jnp.zeros((1, self._Outp), jnp.float32)
                           .at[:, :output_size].set(self.b))

    def forward(self, x):
        assert x.shape[-1] == self.input_size
        B = x.shape[0]
        # Tiny-problem fast path: pallas_call launch/pipeline overhead
        # dominates sub-128k-FLOP GEMMs; same math path (bf16 ops, f32 accum).
        if (self.tiny_fast_path
                and 2 * B * self.input_size * self.output_size
                < _TINY_FLOP_THRESHOLD):
            cdt = jnp.dtype(self.compute_dtype)
            return jnp.dot(x.astype(cdt), self.w_t.astype(cdt),
                           preferred_element_type=jnp.float32) + self.b
        return _linear_forward_padded(
            x, self._w_pad, self._b_pad,
            tk=self._tk, tn=self._tn, out_valid=self.output_size,
            compute_dtype=self.compute_dtype)

    # TODO(synk): train/predic/get_param/plot_model of the original module are
    # host-side training / metric / matplotlib utilities, not kernel ops; only
    # forward() is implemented as a Pallas kernel.


def _reference(x, w_t, b, compute_dtype=jnp.bfloat16):
    # Same math path (bf16 operands, f32 accumulate) as the kernel.
    cdt = jnp.dtype(compute_dtype)
    acc = jnp.dot(x.astype(cdt), w_t.astype(cdt),
                  preferred_element_type=jnp.float32)
    return acc + b.astype(jnp.float32)


if __name__ == "__main__":
    key = jax.random.PRNGKey(0)
    k1, kx1, k2, kx2, k3, kx3 = jax.random.split(key, 6)

    # --- Case 1: tiny shapes matching the module spec ----------------------
    # tiny_fast_path disabled so the Pallas kernel itself runs here:
    # grid (1,1,1), full-extent blocks (8,32)/(32,4)/(8,4), zero padding.
    m1 = LRPallas(32, 4, k1, tiny_fast_path=False)
    x1 = jax.random.normal(kx1, (8, 32), jnp.float32)
    y1 = m1.forward(x1)
    jax.block_until_ready(y1)
    r1 = _reference(x1, m1.w_t, m1.b)
    assert y1.shape == (8, 4)
    assert jnp.allclose(y1, r1, atol=1e-2, rtol=1e-2), (
        float(jnp.max(jnp.abs(y1 - r1))))

    # --- Case 2: mid-size, single block per dim -----------------------------
    # x is passed un-padded in f32 (bf16 cast happens in-kernel), weights were
    # pre-cast once in __init__ -> no wrapper-side HBM round trips.
    m2 = LRPallas(640, 192, k2)
    x2 = jax.random.normal(kx2, (64, 640), jnp.float32)
    y2 = m2.forward(x2)
    jax.block_until_ready(y2)
    r2 = _reference(x2, m2.w_t, m2.b)
    assert y2.shape == (64, 192)
    assert jnp.allclose(y2, r2, atol=2e-2, rtol=2e-2), (
        float(jnp.max(jnp.abs(y2 - r2))))

    # --- Case 3: fully tiled (M, N, K) grid with padding on every axis ------
    # B=600 -> tm=304/Bp=608, In=1536 -> tk=768, Out=640 -> tn=384/Outp=768.
    m3 = LRPallas(1536, 640, k3)
    x3 = jax.random.normal(kx3, (600, 1536), jnp.float32)
    y3 = m3.forward(x3)
    jax.block_until_ready(y3)
    r3 = _reference(x3, m3.w_t, m3.b)
    assert y3.shape == (600, 640)
    assert jnp.allclose(y3, r3, atol=5e-2, rtol=5e-2), (
        float(jnp.max(jnp.abs(y3 - r3))))

    print("KERNEL_OK")
</pallas_src>

<mosaic_0001>
module attributes {stable_mosaic.version = 11 : i64} {
  func.func @_linear_kernel(%arg0: i32, %arg1: i32, %arg2: i32, %arg3: memref<8x32xf32, #tpu.memory_space<vmem>>, %arg4: memref<32x4xbf16, #tpu.memory_space<vmem>>, %arg5: memref<1x4xf32, #tpu.memory_space<vmem>>, %arg6: memref<8x4xf32, #tpu.memory_space<vmem>>, %arg7: memref<8x4xf32, #tpu.memory_space<vmem>>) attributes {dimension_semantics = [#tpu.dimension_semantics<parallel>, #tpu.dimension_semantics<parallel>, #tpu.dimension_semantics<arbitrary>], iteration_bounds = array<i64: 1, 1, 1>, scalar_prefetch = 0 : i64, scratch_operands = 1 : i64, tpu.core_type = #tpu.core_type<tc>, window_params = [{transform_indices = @transform_0, window_bounds = array<i64: 8, 32>}, {transform_indices = @transform_1, window_bounds = array<i64: 32, 4>}, {transform_indices = @transform_2, window_bounds = array<i64: 1, 4>}, {transform_indices = @transform_3, window_bounds = array<i64: 8, 4>}]} {
    %c0_i32 = arith.constant 0 : i32
    %0 = arith.cmpi eq, %arg2, %c0_i32 : i32
    %1 = arith.extui %0 : i1 to i32
    %c0_i32_0 = arith.constant 0 : i32
    %2 = arith.cmpi ne, %1, %c0_i32_0 : i32
    scf.if %2 {
      %cst_10 = arith.constant 0.000000e+00 : f32
      %13 = vector.broadcast %cst_10 : f32 to vector<8x4xf32>
      %c0_11 = arith.constant 0 : index
      %c0_12 = arith.constant 0 : index
      %14 = vector.load %arg7[%c0_11, %c0_12] : memref<8x4xf32, #tpu.memory_space<vmem>>, vector<8x4xf32>
      tpu.vector_store %arg7[%c0_11, %c0_12], %13 {strides = array<i32>} : memref<8x4xf32, #tpu.memory_space<vmem>>, vector<8x4xf32>,
    } else {
    }
    %c0 = arith.constant 0 : index
    %c0_1 = arith.constant 0 : index
    %3 = vector.load %arg7[%c0, %c0_1] : memref<8x4xf32, #tpu.memory_space<vmem>>, vector<8x4xf32>
    %c0_2 = arith.constant 0 : index
    %c0_3 = arith.constant 0 : index
    %4 = vector.load %arg3[%c0_2, %c0_3] : memref<8x32xf32, #tpu.memory_space<vmem>>, vector<8x32xf32>
    %5 = arith.truncf %4 : vector<8x32xf32> to vector<8x32xbf16>
    %c0_4 = arith.constant 0 : index
    %c0_5 = arith.constant 0 : index
    %6 = vector.load %arg4[%c0_4, %c0_5] : memref<32x4xbf16, #tpu.memory_space<vmem>>, vector<32x4xbf16>
    %cst = arith.constant dense<0.000000e+00> : vector<8x4xf32>
    %7 = tpu.matmul %5, %6, %cst {dimension_numbers = #tpu.dot_dimension_numbers<[1], [0], [0], [1], [0, 0, 1, 1], [], []>} : vector<8x32xbf16>, vector<32x4xbf16>, vector<8x4xf32> -> vector<8x4xf32>
    %8 = arith.addf %3, %7 : vector<8x4xf32>
    %c0_6 = arith.constant 0 : index
    %c0_7 = arith.constant 0 : index
    %9 = vector.load %arg7[%c0_6, %c0_7] : memref<8x4xf32, #tpu.memory_space<vmem>>, vector<8x4xf32>
    tpu.vector_store %arg7[%c0_6, %c0_7], %8 {strides = array<i32>} : memref<8x4xf32, #tpu.memory_space<vmem>>, vector<8x4xf32>,
    %c0_i32_8 = arith.constant 0 : i32
    %10 = arith.cmpi eq, %arg2, %c0_i32_8 : i32
    %11 = arith.extui %10 : i1 to i32
    %c0_i32_9 = arith.constant 0 : i32
    %12 = arith.cmpi ne, %11, %c0_i32_9 : i32
    scf.if %12 {
      %c0_10 = arith.constant 0 : index
      %c0_11 = arith.constant 0 : index
      %13 = vector.load %arg7[%c0_10, %c0_11] : memref<8x4xf32, #tpu.memory_space<vmem>>, vector<8x4xf32>
      %c0_12 = arith.constant 0 : index
      %c0_13 = arith.constant 0 : index
      %14 = vector.load %arg5[%c0_12, %c0_13] : memref<1x4xf32, #tpu.memory_space<vmem>>, vector<1x4xf32>
      %15 = vector.broadcast %14 : vector<1x4xf32> to vector<8x4xf32>
      %16 = arith.addf %13, %15 : vector<8x4xf32>
      %c0_14 = arith.constant 0 : index
      %c0_15 = arith.constant 0 : index
      %17 = vector.load %arg6[%c0_14, %c0_15] : memref<8x4xf32, #tpu.memory_space<vmem>>, vector<8x4xf32>
      tpu.vector_store %arg6[%c0_14, %c0_15], %16 {strides = array<i32>} : memref<8x4xf32, #tpu.memory_space<vmem>>, vector<8x4xf32>,
    } else {
    }
    return
  }
  func.func @transform_0(%arg0: i32, %arg1: i32, %arg2: i32) -> (i32, i32) {
    %c0_i32 = arith.constant 0 : i32
    return %arg0, %arg2 : i32, i32
  }
  func.func @transform_1(%arg0: i32, %arg1: i32, %arg2: i32) -> (i32, i32) {
    %c0_i32 = arith.constant 0 : i32
    return %arg2, %arg1 : i32, i32
  }
  func.func @transform_2(%arg0: i32, %arg1: i32, %arg2: i32) -> (i32, i32) {
    %c0_i32 = arith.constant 0 : i32
    %c0_i32_0 = arith.constant 0 : i32
    return %c0_i32, %arg1 : i32, i32
  }
  func.func @transform_3(%arg0: i32, %arg1: i32, %arg2: i32) -> (i32, i32) {
    %c0_i32 = arith.constant 0 : i32
    return %arg0, %arg1 : i32, i32
  }
}

</mosaic_0001>

<llo_original>
// kernel: _linear_forward_padded.1
$region0: #{_linear_forward_padded.1}
  #allocation0 [shape = 'u32[]', space=smem, size = 0x4, offset = 0x4, fixed_abs, tag = 'smem constant byte address 0x4 - core index']
  #allocation1 [shape = 'u32[144,128]{1,0:T(1,128)}', space=vmem, size = 0x12000, scoped, tag = 'internal scratch']
  #allocation2 [shape = 'f32[8,4]{1,0:T(8,128)}', space=vmem, size = 0x1000, scoped, tag = 'scratch operand']
  %s0 = inlined_call_operand.vmem [shape: f32[8,32], index: 0, kind: input, shape index: {}]
  %s1 = inlined_call_operand.vmem [shape: bf16[32,4], index: 1, kind: input, shape index: {}]
  %s2 = inlined_call_operand.vmem [shape: f32[1,4], index: 2, kind: input, shape index: {}]
  %s3 = inlined_call_operand.vmem [shape: f32[8,4], index: 3, kind: output, shape index: {}]
  %s4 = sld [smem:[#allocation0]]
  $region30: #{_linear_forward_padded.1} parent=0
    _
  %s6 = ssub.s32 1, %s4
  %s7 = scalar_select 0, %s6, %s4
  // Predicated region
  $region2: #{_linear_forward_padded.1} parent=0 // pred_check
    _
  $region3: #{_linear_forward_padded.1} parent=0 // pred_check_branch
    %9 = sbr.rel (0) target = $region5
  $region4: #{_linear_forward_padded.1} parent=0 // pred_region
    _
  $region5: #{_linear_forward_padded.1} parent=0 // pred_fallthru
    _
  // Predicated region
  $region6: #{_linear_forward_padded.1} parent=0 // pred_check
    _
  $region7: #{_linear_forward_padded.1} parent=0 // pred_check_branch
    %11 = sbr.rel (0) target = $region9
  $region8: #{_linear_forward_padded.1} parent=0 // pred_region
    _
  $region9: #{_linear_forward_padded.1} parent=0 // pred_fallthru
    _
  // Predicated region
  $region10: #{_linear_forward_padded.1} parent=0 // pred_check
    _
  $region11: #{_linear_forward_padded.1} parent=0 // pred_check_branch
    %13 = sbr.rel (0) target = $region13
  $region12: #{_linear_forward_padded.1} parent=0 // pred_region
    _
  $region13: #{_linear_forward_padded.1} parent=0 // pred_fallthru
    _
  %p15 = scmp.eq.s32.totalorder 0, 0
  // Predicated region
  $region14: #{_linear_forward_padded.1} parent=0 // pred_check
    %p16 = pneg %p15
  $region15: #{_linear_forward_padded.1} parent=0 // pred_check_branch
    %18 = sbr.rel (%p16) target = $region17
  $region16: #{_linear_forward_padded.1} parent=0 // pred_region
    %vm19 = vcmask 31744
    %20 = vst.msk [vmem:[#allocation2] sm:$0xff] %vm19, 0.0
  $region17: #{_linear_forward_padded.1} parent=0 // pred_fallthru
    _
  %v21 = vld [vmem:[#allocation2] sm:$0xff]
  %v22 = vld [vmem:[%s0] sm:$0xff]
  %v23 = vpack.c.bf16 %v22, %v22
  %v24 = vld [vmem:[%s1] sm:$0xf]
  %v25 = vld [vmem:[%s1 + $0x4] sm:$0xf]
  %v26 = vld [vmem:[%s1 + $0x8] sm:$0xf]
  %v27 = vld [vmem:[%s1 + $0xc] sm:$0xf]
  %v32 = vunpack.c.l.b16 %v24
  %v33 = vunpack.c.l.b16 %v25
  %v34 = vunpack.c.l.b16 %v26
  %v35 = vunpack.c.l.b16 %v27
  %v36 = vpack.c.b16 %v33, %v32
  %v37 = vpack.c.b16 %v35, %v34
  %vm40 = vcmask 261120
  %v42 = vsel %vm40, %v23, 0
  %44 = vmatprep.subr.bf16.mxu0 0
  %45 = vmatpush1.bf16.msra.mxu0 %v36
  %46 = vmatprep.subr.bf16.mxu0 0
  %47 = vmatpush1.bf16.msra.mxu0 %v37
  %48 = vmatprep.subr.bf16.mxu0 0
  %49 = vmatpush1.bf16.msra.mxu0 0
  %50 = vmatprep.subr.bf16.mxu0 0
  %51 = vmatpush1.bf16.msra.mxu0 0
  %52 = vmatprep.subr.bf16.mxu0 0
  %53 = vmatpush1.bf16.msra.mxu0 0
  %54 = vmatprep.subr.bf16.mxu0 0
  %55 = vmatpush1.bf16.msra.mxu0 0
  %56 = vmatprep.subr.bf16.mxu0 0
  %57 = vmatpush1.bf16.msra.mxu0 0
  %58 = vmatprep.subr.bf16.mxu0 0
  %59 = vmatpush1.bf16.msra.mxu0 0
  %60 = vmatprep.subr.bf16.mxu0 0
  %61 = vmatpush1.bf16.msra.mxu0 0
  %62 = vmatprep.subr.bf16.mxu0 0
  %63 = vmatpush1.bf16.msra.mxu0 0
  %64 = vmatprep.subr.bf16.mxu0 0
  %65 = vmatpush1.bf16.msra.mxu0 0
  %66 = vmatprep.subr.bf16.mxu0 0
  %67 = vmatpush1.bf16.msra.mxu0 0
  %68 = vmatprep.subr.bf16.mxu0 0
  %69 = vmatpush1.bf16.msra.mxu0 0
  %70 = vmatprep.subr.bf16.mxu0 0
  %71 = vmatpush1.bf16.msra.mxu0 0
  %72 = vmatprep.subr.bf16.mxu0 0
  %73 = vmatpush1.bf16.msra.mxu0 0
  %74 = vmatprep.subr.bf16.mxu0 0
  %75 = vmatpush1.bf16.msra.mxu0 0
  %76 = vmatprep.mubr.bf16.mxu0 0
  %77 = vmatmul.mubr.bf16.gmra.mrb[0].mxu0 %v42
  %v78 = vpop.f32.mrb[0].mxu0
  %v79 = vadd.f32 0.0, %v78
  %v80 = vpop.f32.mrb[0].mxu0
  %v81 = vpop.f32.mrb[0].mxu0
  %v82 = vpop.f32.mrb[0].mxu0
  %83 = vdwg.mxu0
  %v84 = vadd.f32 %v21, %v79
  %vm85 = vcmask 31744
  %86 = vst.msk [vmem:[#allocation2] sm:$0xff] %vm85, %v84
  // Predicated region
  $region18: #{_linear_forward_padded.1} parent=0 // pred_check
    %p87 = pneg %p15
  $region19: #{_linear_forward_padded.1} parent=0 // pred_check_branch
    %89 = sbr.rel (%p87) target = $region21
  $region20: #{_linear_forward_padded.1} parent=0 // pred_region
    %v90 = vld [vmem:[#allocation2] sm:$0xff]
    %v91 = vld [vmem:[%s2] sm:$0x1]
    %v93 = vlaneseq
    %v94 = vshrl.u32 %v93, 7
    %v95 = vsub.s32 0, %v94
    %v96 = vrot.slane %v91, %v95
    %v98 = vadd.f32 %v90, %v96
    %99 = vst.msk [vmem:[%s3] sm:$0xff] %vm85, %v98
  $region21: #{_linear_forward_padded.1} parent=0 // pred_fallthru
    _
  // Predicated region
  $region22: #{_linear_forward_padded.1} parent=0 // pred_check
    _
  $region23: #{_linear_forward_padded.1} parent=0 // pred_check_branch
    %101 = sbr.rel (0) target = $region25
  $region24: #{_linear_forward_padded.1} parent=0 // pred_region
    _
  $region25: #{_linear_forward_padded.1} parent=0 // pred_fallthru
    _
  // Predicated region
  $region26: #{_linear_forward_padded.1} parent=0 // pred_check
    _
  $region27: #{_linear_forward_padded.1} parent=0 // pred_check_branch
    %103 = sbr.rel (0) target = $region29
  $region28: #{_linear_forward_padded.1} parent=0 // pred_region
    _
  $region29: #{_linear_forward_padded.1} parent=0 // pred_fallthru
    _

</llo_original>
